<compile_context>
chip_gen: v6e
topology: v6e:2x2x1
jax: 0.10.0
libtpu: 0.0.40
codegen_flags: <defaults>
</compile_context>

<pallas_src>
import functools

import jax
import jax.numpy as jnp
from jax.experimental import pallas as pl
from jax.experimental.pallas import tpu as pltpu


def _transition_kernel(x_ref, w1_ref, b1_ref, g_ref, beta_ref,
                       w_head_ref, b_head_ref, out_ref,
                       *, feat_dim, min_sigma, max_sigma, ln_eps, inv_hidden):
    # x = fc(x)  -- single MXU pass with f32 accumulation.
    h = jnp.dot(x_ref[...], w1_ref[...], preferred_element_type=jnp.float32)
    h = h + b1_ref[...]

    # x = ln(x)  -- LayerNorm over the last dim (eps=1e-5, elementwise affine).
    mean = jnp.sum(h, axis=-1, keepdims=True) * inv_hidden
    centered = h - mean
    var = jnp.sum(centered * centered, axis=-1, keepdims=True) * inv_hidden
    hn = centered * jax.lax.rsqrt(var + ln_eps)          # rsqrt -> EUP slot
    hn = hn * g_ref[...] + beta_ref[...]

    # x = relu(x)
    hn = jnp.maximum(hn, 0.0)

    # Fused heads: one MXU pass, lane-dense (TB, out_pad) result.
    #   cols [0, feat)        -> mu    = fc_mu(x)
    #   cols [feat, 2*feat)   -> sigma = min + (max-min)*sigmoid(fc_sigma(x))
    #   cols [2*feat, out_pad)-> zero padding (sliced off in the wrapper)
    head = jnp.dot(hn, w_head_ref[...], preferred_element_type=jnp.float32)
    head = head + b_head_ref[...]

    lane = jax.lax.broadcasted_iota(jnp.int32, head.shape, dimension=1)
    is_sigma = (lane >= feat_dim) & (lane < 2 * feat_dim)
    sigma_vals = min_sigma + (max_sigma - min_sigma) * jax.nn.sigmoid(head)
    out_ref[...] = jnp.where(is_sigma, sigma_vals, head).astype(out_ref.dtype)


def probabilistic_transition_forward(x, params, *, max_sigma=10.0, min_sigma=1e-4):
    """x: (B, encoder_feature_dim + action_dim) float32. Returns (mu, sigma)."""
    B, in_dim = x.shape
    hidden = params["w1"].shape[1]          # layer_width
    feat_dim = params["w_mu"].shape[1]      # encoder_feature_dim

    # --- Fuse the two heads and pad the output slab to a multiple of 128 lanes.
    out_pad = pl.cdiv(2 * feat_dim, 128) * 128
    w_head = jnp.concatenate([params["w_mu"], params["w_sigma"]], axis=1)
    b_head = jnp.concatenate([params["b_mu"], params["b_sigma"]], axis=1)
    pad_cols = out_pad - 2 * feat_dim
    if pad_cols:
        w_head = jnp.pad(w_head, ((0, 0), (0, pad_cols)))
        b_head = jnp.pad(b_head, ((0, 0), (0, pad_cols)))

    # --- Batch tiling: largest power-of-two tile (rows padded to x8) such that
    #     resident weights + double-buffered activation/output tiles fit VMEM.
    weight_bytes = 4 * (params["w1"].size + params["b1"].size
                        + params["ln_g"].size + params["ln_b"].size
                        + w_head.size + b_head.size)
    vmem_budget = 24 * 1024 * 1024          # headroom under the 32 MiB scoped default
    TB = 1024
    while TB > 8:
        io_bytes = 2 * 4 * TB * (in_dim + out_pad)          # double-buffered x / out
        scratch_bytes = 4 * TB * (hidden + out_pad)         # in-kernel intermediates
        if weight_bytes + io_bytes + scratch_bytes <= vmem_budget:
            break
        TB //= 2

    b_pad8 = ((B + 7) // 8) * 8
    TB = min(TB, b_pad8)
    B_pad = ((B + TB - 1) // TB) * TB
    x_p = x if B_pad == B else jnp.pad(x, ((0, B_pad - B), (0, 0)))

    grid = (B_pad // TB,)

    def resident(shape):
        # Weights / biases: same block every grid step -> stay resident in VMEM.
        return pl.BlockSpec(shape, lambda i: tuple(0 for _ in shape))

    kernel = functools.partial(
        _transition_kernel,
        feat_dim=feat_dim,
        min_sigma=float(min_sigma),
        max_sigma=float(max_sigma),
        ln_eps=1e-5,
        inv_hidden=1.0 / float(hidden),
    )

    out = pl.pallas_call(
        kernel,
        out_shape=jax.ShapeDtypeStruct((B_pad, out_pad), jnp.float32),
        grid=grid,
        in_specs=[
            pl.BlockSpec((TB, in_dim), lambda i: (i, 0)),   # activations: tiled over batch
            resident(params["w1"].shape),
            resident(params["b1"].shape),
            resident(params["ln_g"].shape),
            resident(params["ln_b"].shape),
            resident(w_head.shape),
            resident(b_head.shape),
        ],
        out_specs=pl.BlockSpec((TB, out_pad), lambda i: (i, 0)),
        compiler_params=pltpu.CompilerParams(
            dimension_semantics=("parallel",)),
    )(x_p, params["w1"], params["b1"], params["ln_g"], params["ln_b"],
      w_head, b_head)

    mu = out[:B, :feat_dim]
    sigma = out[:B, feat_dim:2 * feat_dim]
    return mu, sigma


def init_params(key, encoder_feature_dim, action_dim, layer_width):
    """Deterministic synthetic init matching the nn.Module shapes.
    Weights are stored as (in_dim, out_dim) = PyTorch weight.T."""
    in_dim = encoder_feature_dim + action_dim
    k1, k2, k3, k4, k5, k6 = jax.random.split(key, 6)

    def uniform_init(k, shape, fan_in):
        bound = 1.0 / jnp.sqrt(fan_in)
        return jax.random.uniform(k, shape, jnp.float32, -bound, bound)

    return {
        "w1": uniform_init(k1, (in_dim, layer_width), in_dim),
        "b1": uniform_init(k2, (1, layer_width), in_dim),
        "ln_g": jnp.ones((1, layer_width), jnp.float32),
        "ln_b": jnp.zeros((1, layer_width), jnp.float32),
        "w_mu": uniform_init(k3, (layer_width, encoder_feature_dim), layer_width),
        "b_mu": uniform_init(k4, (1, encoder_feature_dim), layer_width),
        "w_sigma": uniform_init(k5, (layer_width, encoder_feature_dim), layer_width),
        "b_sigma": uniform_init(k6, (1, encoder_feature_dim), layer_width),
    }


def _reference_forward(x, params, max_sigma=10.0, min_sigma=1e-4):
    h = x @ params["w1"] + params["b1"]
    mean = h.mean(-1, keepdims=True)
    var = ((h - mean) ** 2).mean(-1, keepdims=True)
    hn = (h - mean) / jnp.sqrt(var + 1e-5) * params["ln_g"] + params["ln_b"]
    hn = jnp.maximum(hn, 0.0)
    mu = hn @ params["w_mu"] + params["b_mu"]
    sigma = jax.nn.sigmoid(hn @ params["w_sigma"] + params["b_sigma"])
    sigma = min_sigma + (max_sigma - min_sigma) * sigma
    return mu, sigma


if __name__ == "__main__":
    encoder_feature_dim = 32
    action_dim = 4
    layer_width = 32
    batch = 8

    key = jax.random.PRNGKey(0)
    kx, kp = jax.random.split(key)
    x = jax.random.normal(kx, (batch, encoder_feature_dim + action_dim), jnp.float32)
    params = init_params(kp, encoder_feature_dim, action_dim, layer_width)

    mu, sigma = probabilistic_transition_forward(x, params)
    jax.block_until_ready((mu, sigma))

    mu_ref, sigma_ref = _reference_forward(x, params)
    assert jnp.allclose(mu, mu_ref, atol=1e-4, rtol=1e-4)
    assert jnp.allclose(sigma, sigma_ref, atol=1e-4, rtol=1e-4)

    print("KERNEL_OK")
</pallas_src>

<mosaic_0001>
module attributes {stable_mosaic.version = 11 : i64} {
  func.func @_transition_kernel(%arg0: i32, %arg1: memref<8x36xf32, #tpu.memory_space<vmem>>, %arg2: memref<36x32xf32, #tpu.memory_space<vmem>>, %arg3: memref<1x32xf32, #tpu.memory_space<vmem>>, %arg4: memref<1x32xf32, #tpu.memory_space<vmem>>, %arg5: memref<1x32xf32, #tpu.memory_space<vmem>>, %arg6: memref<32x128xf32, #tpu.memory_space<vmem>>, %arg7: memref<1x128xf32, #tpu.memory_space<vmem>>, %arg8: memref<8x128xf32, #tpu.memory_space<vmem>>) attributes {dimension_semantics = [#tpu.dimension_semantics<parallel>], iteration_bounds = array<i64: 1>, scalar_prefetch = 0 : i64, scratch_operands = 0 : i64, tpu.core_type = #tpu.core_type<tc>, window_params = [{transform_indices = @transform_0, window_bounds = array<i64: 8, 36>}, {pipeline_mode = #tpu.pipeline_mode<synchronous>, transform_indices = @transform_1, window_bounds = array<i64: 36, 32>}, {pipeline_mode = #tpu.pipeline_mode<synchronous>, transform_indices = @transform_2, window_bounds = array<i64: 1, 32>}, {pipeline_mode = #tpu.pipeline_mode<synchronous>, transform_indices = @transform_3, window_bounds = array<i64: 1, 32>}, {pipeline_mode = #tpu.pipeline_mode<synchronous>, transform_indices = @transform_4, window_bounds = array<i64: 1, 32>}, {pipeline_mode = #tpu.pipeline_mode<synchronous>, transform_indices = @transform_5, window_bounds = array<i64: 32, 128>}, {pipeline_mode = #tpu.pipeline_mode<synchronous>, transform_indices = @transform_6, window_bounds = array<i64: 1, 128>}, {transform_indices = @transform_7, window_bounds = array<i64: 8, 128>}]} {
    %c0 = arith.constant 0 : index
    %c0_0 = arith.constant 0 : index
    %0 = vector.load %arg1[%c0, %c0_0] : memref<8x36xf32, #tpu.memory_space<vmem>>, vector<8x36xf32>
    %c0_1 = arith.constant 0 : index
    %c0_2 = arith.constant 0 : index
    %1 = vector.load %arg2[%c0_1, %c0_2] : memref<36x32xf32, #tpu.memory_space<vmem>>, vector<36x32xf32>
    %cst = arith.constant dense<0.000000e+00> : vector<8x32xf32>
    %2 = tpu.matmul %0, %1, %cst {dimension_numbers = #tpu.dot_dimension_numbers<[1], [0], [0], [1], [0, 0, 1, 1], [], []>} : vector<8x36xf32>, vector<36x32xf32>, vector<8x32xf32> -> vector<8x32xf32>
    %c0_3 = arith.constant 0 : index
    %c0_4 = arith.constant 0 : index
    %3 = vector.load %arg3[%c0_3, %c0_4] : memref<1x32xf32, #tpu.memory_space<vmem>>, vector<1x32xf32>
    %4 = vector.broadcast %3 : vector<1x32xf32> to vector<8x32xf32>
    %5 = arith.addf %2, %4 : vector<8x32xf32>
    %cst_5 = arith.constant dense<0.000000e+00> : vector<8xf32>
    %6 = vector.multi_reduction <add>, %5, %cst_5 [1] : vector<8x32xf32> to vector<8xf32>
    %7 = vector.shape_cast %6 : vector<8xf32> to vector<8x1xf32>
    %cst_6 = arith.constant 3.125000e-02 : f32
    %8 = vector.broadcast %cst_6 : f32 to vector<8x1xf32>
    %9 = arith.mulf %7, %8 : vector<8x1xf32>
    %10 = vector.broadcast %9 : vector<8x1xf32> to vector<8x32xf32>
    %11 = arith.subf %5, %10 : vector<8x32xf32>
    %12 = arith.mulf %11, %11 : vector<8x32xf32>
    %cst_7 = arith.constant dense<0.000000e+00> : vector<8xf32>
    %13 = vector.multi_reduction <add>, %12, %cst_7 [1] : vector<8x32xf32> to vector<8xf32>
    %14 = vector.shape_cast %13 : vector<8xf32> to vector<8x1xf32>
    %cst_8 = arith.constant 3.125000e-02 : f32
    %15 = vector.broadcast %cst_8 : f32 to vector<8x1xf32>
    %16 = arith.mulf %14, %15 : vector<8x1xf32>
    %cst_9 = arith.constant 9.99999974E-6 : f32
    %17 = vector.broadcast %cst_9 : f32 to vector<8x1xf32>
    %18 = arith.addf %16, %17 : vector<8x1xf32>
    %19 = math.rsqrt %18 : vector<8x1xf32>
    %20 = vector.broadcast %19 : vector<8x1xf32> to vector<8x32xf32>
    %21 = arith.mulf %11, %20 : vector<8x32xf32>
    %c0_10 = arith.constant 0 : index
    %c0_11 = arith.constant 0 : index
    %22 = vector.load %arg4[%c0_10, %c0_11] : memref<1x32xf32, #tpu.memory_space<vmem>>, vector<1x32xf32>
    %23 = vector.broadcast %22 : vector<1x32xf32> to vector<8x32xf32>
    %24 = arith.mulf %21, %23 : vector<8x32xf32>
    %c0_12 = arith.constant 0 : index
    %c0_13 = arith.constant 0 : index
    %25 = vector.load %arg5[%c0_12, %c0_13] : memref<1x32xf32, #tpu.memory_space<vmem>>, vector<1x32xf32>
    %26 = vector.broadcast %25 : vector<1x32xf32> to vector<8x32xf32>
    %27 = arith.addf %24, %26 : vector<8x32xf32>
    %cst_14 = arith.constant 0.000000e+00 : f32
    %28 = vector.broadcast %cst_14 : f32 to vector<8x32xf32>
    %29 = arith.maximumf %27, %28 : vector<8x32xf32>
    %c0_15 = arith.constant 0 : index
    %c0_16 = arith.constant 0 : index
    %30 = vector.load %arg6[%c0_15, %c0_16] : memref<32x128xf32, #tpu.memory_space<vmem>>, vector<32x128xf32>
    %cst_17 = arith.constant dense<0.000000e+00> : vector<8x128xf32>
    %31 = tpu.matmul %29, %30, %cst_17 {dimension_numbers = #tpu.dot_dimension_numbers<[1], [0], [0], [1], [0, 0, 1, 1], [], []>} : vector<8x32xf32>, vector<32x128xf32>, vector<8x128xf32> -> vector<8x128xf32>
    %c0_18 = arith.constant 0 : index
    %c0_19 = arith.constant 0 : index
    %32 = vector.load %arg7[%c0_18, %c0_19] : memref<1x128xf32, #tpu.memory_space<vmem>>, vector<1x128xf32>
    %33 = vector.broadcast %32 : vector<1x128xf32> to vector<8x128xf32>
    %34 = arith.addf %31, %33 : vector<8x128xf32>
    %35 = tpu.iota {dimensions = array<i32: 1>} : vector<8x128xi32>
    %c32_i32 = arith.constant 32 : i32
    %36 = vector.broadcast %c32_i32 : i32 to vector<8x128xi32>
    %37 = arith.cmpi sge, %35, %36 : vector<8x128xi32>
    %c64_i32 = arith.constant 64 : i32
    %38 = vector.broadcast %c64_i32 : i32 to vector<8x128xi32>
    %39 = arith.cmpi slt, %35, %38 : vector<8x128xi32>
    %40 = arith.andi %37, %39 : vector<8x128xi1>
    %41 = arith.negf %34 : vector<8x128xf32>
    %42 = math.exp %41 : vector<8x128xf32>
    %cst_20 = arith.constant 1.000000e+00 : f32
    %43 = vector.broadcast %cst_20 : f32 to vector<8x128xf32>
    %44 = arith.addf %43, %42 : vector<8x128xf32>
    %45 = arith.divf %43, %44 : vector<8x128xf32>
    %cst_21 = arith.constant 9.99989986 : f32
    %46 = vector.broadcast %cst_21 : f32 to vector<8x128xf32>
    %47 = arith.mulf %46, %45 : vector<8x128xf32>
    %cst_22 = arith.constant 9.99999974E-5 : f32
    %48 = vector.broadcast %cst_22 : f32 to vector<8x128xf32>
    %49 = arith.addf %48, %47 : vector<8x128xf32>
    %50 = arith.select %40, %49, %34 : vector<8x128xi1>, vector<8x128xf32>
    %c0_23 = arith.constant 0 : index
    %c0_24 = arith.constant 0 : index
    %51 = vector.load %arg8[%c0_23, %c0_24] : memref<8x128xf32, #tpu.memory_space<vmem>>, vector<8x128xf32>
    tpu.vector_store %arg8[%c0_23, %c0_24], %50 {strides = array<i32>} : memref<8x128xf32, #tpu.memory_space<vmem>>, vector<8x128xf32>,
    return
  }
  func.func @transform_0(%arg0: i32) -> (i32, i32) {
    %c0_i32 = arith.constant 0 : i32
    %c0_i32_0 = arith.constant 0 : i32
    return %arg0, %c0_i32 : i32, i32
  }
  func.func @transform_1(%arg0: i32) -> (i32, i32) {
    %c0_i32 = arith.constant 0 : i32
    %c0_i32_0 = arith.constant 0 : i32
    %c0_i32_1 = arith.constant 0 : i32
    return %c0_i32, %c0_i32_0 : i32, i32
  }
  func.func @transform_2(%arg0: i32) -> (i32, i32) {
    %c0_i32 = arith.constant 0 : i32
    %c0_i32_0 = arith.constant 0 : i32
    %c0_i32_1 = arith.constant 0 : i32
    return %c0_i32, %c0_i32_0 : i32, i32
  }
  func.func @transform_3(%arg0: i32) -> (i32, i32) {
    %c0_i32 = arith.constant 0 : i32
    %c0_i32_0 = arith.constant 0 : i32
    %c0_i32_1 = arith.constant 0 : i32
    return %c0_i32, %c0_i32_0 : i32, i32
  }
  func.func @transform_4(%arg0: i32) -> (i32, i32) {
    %c0_i32 = arith.constant 0 : i32
    %c0_i32_0 = arith.constant 0 : i32
    %c0_i32_1 = arith.constant 0 : i32
    return %c0_i32, %c0_i32_0 : i32, i32
  }
  func.func @transform_5(%arg0: i32) -> (i32, i32) {
    %c0_i32 = arith.constant 0 : i32
    %c0_i32_0 = arith.constant 0 : i32
    %c0_i32_1 = arith.constant 0 : i32
    return %c0_i32, %c0_i32_0 : i32, i32
  }
  func.func @transform_6(%arg0: i32) -> (i32, i32) {
    %c0_i32 = arith.constant 0 : i32
    %c0_i32_0 = arith.constant 0 : i32
    %c0_i32_1 = arith.constant 0 : i32
    return %c0_i32, %c0_i32_0 : i32, i32
  }
  func.func @transform_7(%arg0: i32) -> (i32, i32) {
    %c0_i32 = arith.constant 0 : i32
    %c0_i32_0 = arith.constant 0 : i32
    return %arg0, %c0_i32 : i32, i32
  }
}

</mosaic_0001>

<llo_original>
// kernel: tpu_custom_call.1
$region0: #{tpu_custom_call.1}
  #allocation0 [shape = 'u32[]', space=smem, size = 0x4, offset = 0x4, fixed_abs, tag = 'smem constant byte address 0x4 - core index']
  #allocation1 [shape = 'u32[144,128]{1,0:T(1,128)}', space=vmem, size = 0x12000, scoped, tag = 'internal scratch']
  %s0 = inlined_call_operand.vmem [shape: f32[8,36], index: 0, kind: input, shape index: {}]
  %s1 = inlined_call_operand.vmem [shape: f32[36,32], index: 1, kind: input, shape index: {}]
  %s2 = inlined_call_operand.vmem [shape: f32[1,32], index: 2, kind: input, shape index: {}]
  %s3 = inlined_call_operand.vmem [shape: f32[1,32], index: 3, kind: input, shape index: {}]
  %s4 = inlined_call_operand.vmem [shape: f32[1,32], index: 4, kind: input, shape index: {}]
  %s5 = inlined_call_operand.vmem [shape: f32[32,128], index: 5, kind: input, shape index: {}]
  %s6 = inlined_call_operand.vmem [shape: f32[1,128], index: 6, kind: input, shape index: {}]
  %s7 = inlined_call_operand.hbm [shape: f32[8,128], index: 7, kind: output, shape index: {}]
  %s8 = sld [smem:[#allocation0]]
  $region38: #{tpu_custom_call.1} parent=0
    _
  %s10 = ssub.s32 1, %s8
  %s11 = scalar_select 0, %s10, %s8
  $region1: #{tpu_custom_call.1} parent=0
    #allocation2 [shape = 'u8[4096]{0}', space=vmem, size = 0x1000, scoped, tag = 'output window, operand 0, single buffered']
    #allocation3 [shape = 's32[1]{0}', space=sflag, size = 0x4, scoped, tag = 'scoped memory for tpu_custom_call.1']
    %12 = vsyncpa [#allocation3], 0
    // Predicated region
    $region2: #{tpu_custom_call.1} parent=1 // pred_check
      _
    $region3: #{tpu_custom_call.1} parent=1 // pred_check_branch
      %14 = sbr.rel (0) target = $region5
    $region4: #{tpu_custom_call.1} parent=1 // pred_region
      _
    $region5: #{tpu_custom_call.1} parent=1 // pred_fallthru
      _
    // Predicated region
    $region6: #{tpu_custom_call.1} parent=1 // pred_check
      _
    $region7: #{tpu_custom_call.1} parent=1 // pred_check_branch
      %16 = sbr.rel (0) target = $region9
    $region8: #{tpu_custom_call.1} parent=1 // pred_region
      _
    $region9: #{tpu_custom_call.1} parent=1 // pred_fallthru
      _
    // Predicated region
    $region10: #{tpu_custom_call.1} parent=1 // pred_check
      _
    $region11: #{tpu_custom_call.1} parent=1 // pred_check_branch
      %18 = sbr.rel (0) target = $region13
    $region12: #{tpu_custom_call.1} parent=1 // pred_region
      _
    $region13: #{tpu_custom_call.1} parent=1 // pred_fallthru
      _
    // Predicated region
    $region14: #{tpu_custom_call.1} parent=1 // pred_check
      _
    $region15: #{tpu_custom_call.1} parent=1 // pred_check_branch
      %20 = sbr.rel (0) target = $region17
    $region16: #{tpu_custom_call.1} parent=1 // pred_region
      _
    $region17: #{tpu_custom_call.1} parent=1 // pred_fallthru
      _
    // Predicated region
    $region18: #{tpu_custom_call.1} parent=1 // pred_check
      _
    $region19: #{tpu_custom_call.1} parent=1 // pred_check_branch
      %22 = sbr.rel (0) target = $region21
    $region20: #{tpu_custom_call.1} parent=1 // pred_region
      _
    $region21: #{tpu_custom_call.1} parent=1 // pred_fallthru
      _
    // Predicated region
    $region22: #{tpu_custom_call.1} parent=1 // pred_check
      _
    $region23: #{tpu_custom_call.1} parent=1 // pred_check_branch
      %24 = sbr.rel (0) target = $region25
    $region24: #{tpu_custom_call.1} parent=1 // pred_region
      _
    $region25: #{tpu_custom_call.1} parent=1 // pred_fallthru
      _
    // Predicated region
    $region26: #{tpu_custom_call.1} parent=1 // pred_check
      _
    $region27: #{tpu_custom_call.1} parent=1 // pred_check_branch
      %26 = sbr.rel (0) target = $region29
    $region28: #{tpu_custom_call.1} parent=1 // pred_region
      _
    $region29: #{tpu_custom_call.1} parent=1 // pred_fallthru
      _
    %v27 = vld [vmem:[%s0] sm:$0xff]
    %v28 = vld [vmem:[%s1] sm:$0xff]
    %v29 = vld [vmem:[%s1 + $0x8] sm:$0xff]
    %v30 = vld [vmem:[%s1 + $0x10] sm:$0xff]
    %v31 = vld [vmem:[%s1 + $0x18] sm:$0xff]
    %v32 = vld [vmem:[%s1 + $0x20] sm:$0xf]
    %v33 = vld [vmem:[%s2] sm:$0x1]
    %v35 = vlaneseq
    %v36 = vshrl.u32 %v35, 7
    %v37 = vsub.s32 0, %v36
    %v38 = vrot.slane %v33, %v37
    %vm40 = vcmask 293888
    %v42 = vsel %vm40, %v27, 0
    %vm44 = vcmask 1043456
    %v46 = vsel %vm44, %v32, 0
    %48 = vmatprep.subr.mxu0 0.0
    %49 = vmatpush1.msra.mxu0 0.0
    %50 = vmatprep.subr.mxu0 0.0
    %51 = vmatpush1.msra.mxu0 0.0
    %52 = vmatprep.subr.mxu0 0.0
    %53 = vmatpush1.msra.mxu0 0.0
    %54 = vmatprep.subr.mxu0 0.0
    %55 = vmatpush1.msra.mxu0 0.0
    %56 = vmatprep.subr.mxu0 0.0
    %57 = vmatpush1.msra.mxu0 0.0
    %58 = vmatprep.subr.mxu0 0.0
    %59 = vmatpush1.msra.mxu0 0.0
    %60 = vmatprep.subr.mxu0 0.0
    %61 = vmatpush1.msra.mxu0 0.0
    %62 = vmatprep.subr.mxu0 0.0
    %63 = vmatpush1.msra.mxu0 0.0
    %64 = vmatprep.subr.mxu0 0.0
    %65 = vmatpush1.msra.mxu0 0.0
    %66 = vmatprep.subr.mxu0 0.0
    %67 = vmatpush1.msra.mxu0 0.0
    %68 = vmatprep.subr.mxu0 0.0
    %69 = vmatpush1.msra.mxu0 0.0
    %70 = vmatprep.subr.mxu0 0.0
    %71 = vmatpush1.msra.mxu0 %v46
    %72 = vmatprep.subr.mxu0 0.0
    %73 = vmatpush1.msra.mxu0 %v31
    %74 = vmatprep.subr.mxu0 0.0
    %75 = vmatpush1.msra.mxu0 %v30
    %76 = vmatprep.subr.mxu0 0.0
    %77 = vmatpush1.msra.mxu0 %v29
    %78 = vmatprep.subr.mxu0 0.0
    %79 = vmatpush1.msra.mxu0 %v28
    %80 = vmatprep.subr.mxu0 0.0
    %81 = vmatpush2.msra.mxu0 0.0
    %82 = vmatprep.subr.mxu0 0.0
    %83 = vmatpush2.msra.mxu0 0.0
    %84 = vmatprep.subr.mxu0 0.0
    %85 = vmatpush2.msra.mxu0 0.0
    %86 = vmatprep.subr.mxu0 0.0
    %87 = vmatpush2.msra.mxu0 0.0
    %88 = vmatprep.subr.mxu0 0.0
    %89 = vmatpush2.msra.mxu0 0.0
    %90 = vmatprep.subr.mxu0 0.0
    %91 = vmatpush2.msra.mxu0 0.0
    %92 = vmatprep.subr.mxu0 0.0
    %93 = vmatpush2.msra.mxu0 0.0
    %94 = vmatprep.subr.mxu0 0.0
    %95 = vmatpush2.msra.mxu0 0.0
    %96 = vmatprep.subr.mxu0 0.0
    %97 = vmatpush2.msra.mxu0 0.0
    %98 = vmatprep.subr.mxu0 0.0
    %99 = vmatpush2.msra.mxu0 0.0
    %100 = vmatprep.subr.mxu0 0.0
    %101 = vmatpush2.msra.mxu0 0.0
    %102 = vmatprep.subr.mxu0 0.0
    %103 = vmatpush2.msra.mxu0 0.0
    %104 = vmatprep.subr.mxu0 0.0
    %105 = vmatpush2.msra.mxu0 0.0
    %106 = vmatprep.subr.mxu0 0.0
    %107 = vmatpush2.msra.mxu0 0.0
    %108 = vmatprep.subr.mxu0 0.0
    %109 = vmatpush2.msra.mxu0 0.0
    %110 = vmatprep.subr.mxu0 0.0
    %111 = vmatpush2.msra.mxu0 0.0
    %112 = vmatprep.mubr.f32.mxu0 0.0
    %113 = vmatmul.mubr.f32.gmra.mxu0 %v42
    %v114 = vpop.f32.mrf.mxu0
    %v115 = vadd.f32 %v38, %v114
    %v116 = vpop.f32.mrf.mxu0
    %117 = vdwg.mxu0
    %vm118 = vcmask 261120
    %v119 = vsel %vm118, %v115, 0.0
    %120 = vadd.xlane.f32.xlu0 %v119
    %v121 = vpop.xlane.xlu0 %120
    %v122 = vmul.f32 %v121, 0.03125
    %v123 = vsub.f32 %v115, %v122
    %v124 = vmul.f32 %v123, %v123
    %v125 = vsel %vm118, %v124, 0.0
    %126 = vadd.xlane.f32.xlu0 %v125
    %v127 = vpop.xlane.xlu0 %126
    %v128 = vmul.f32 %v127, 0.03125
    %v129 = vadd.f32 %v128, 1e-05
    %v130 = vrsqrt.pop %v129
    %v131 = vmul.f32 %v123, %v130
    %v132 = vld [vmem:[%s3] sm:$0x1]
    %v134 = vlaneseq
    %v135 = vshrl.u32 %v134, 7
    %v136 = vsub.s32 0, %v135
    %v137 = vrot.slane %v132, %v136
    %v139 = vmul.f32 %v131, %v137
    %v140 = vld [vmem:[%s4] sm:$0x1]
    %v142 = vlaneseq
    %v143 = vshrl.u32 %v142, 7
    %v144 = vsub.s32 0, %v143
    %v145 = vrot.slane %v140, %v144
    %v147 = vadd.f32 %v139, %v145
    %v148 = vmax.f32 %v147, 0.0
    %v149 = vld [vmem:[%s5] sm:$0xff]
    %v150 = vld [vmem:[%s5 + $0x8] sm:$0xff]
    %v151 = vld [vmem:[%s5 + $0x10] sm:$0xff]
    %v152 = vld [vmem:[%s5 + $0x18] sm:$0xff]
    %v153 = vld [vmem:[%s6] sm:$0x1]
    %v155 = vlaneseq
    %v156 = vshrl.u32 %v155, 7
    %v157 = vsub.s32 0, %v156
    %v158 = vrot.slane %v153, %v157
    %v161 = vsel %vm118, %v148, 0
    %163 = vmatprep.subr.mxu0 0.0
    %164 = vmatpush1.msra.mxu0 0.0
    %165 = vmatprep.subr.mxu0 0.0
    %166 = vmatpush1.msra.mxu0 0.0
    %167 = vmatprep.subr.mxu0 0.0
    %168 = vmatpush1.msra.mxu0 0.0
    %169 = vmatprep.subr.mxu0 0.0
    %170 = vmatpush1.msra.mxu0 0.0
    %171 = vmatprep.subr.mxu0 0.0
    %172 = vmatpush1.msra.mxu0 0.0
    %173 = vmatprep.subr.mxu0 0.0
    %174 = vmatpush1.msra.mxu0 0.0
    %175 = vmatprep.subr.mxu0 0.0
    %176 = vmatpush1.msra.mxu0 0.0
    %177 = vmatprep.subr.mxu0 0.0
    %178 = vmatpush1.msra.mxu0 0.0
    %179 = vmatprep.subr.mxu0 0.0
    %180 = vmatpush1.msra.mxu0 0.0
    %181 = vmatprep.subr.mxu0 0.0
    %182 = vmatpush1.msra.mxu0 0.0
    %183 = vmatprep.subr.mxu0 0.0
    %184 = vmatpush1.msra.mxu0 0.0
    %185 = vmatprep.subr.mxu0 0.0
    %186 = vmatpush1.msra.mxu0 0.0
    %187 = vmatprep.subr.mxu0 0.0
    %188 = vmatpush1.msra.mxu0 %v152
    %189 = vmatprep.subr.mxu0 0.0
    %190 = vmatpush1.msra.mxu0 %v151
    %191 = vmatprep.subr.mxu0 0.0
    %192 = vmatpush1.msra.mxu0 %v150
    %193 = vmatprep.subr.mxu0 0.0
    %194 = vmatpush1.msra.mxu0 %v149
    %195 = vmatprep.subr.mxu0 0.0
    %196 = vmatpush2.msra.mxu0 0.0
    %197 = vmatprep.subr.mxu0 0.0
    %198 = vmatpush2.msra.mxu0 0.0
    %199 = vmatprep.subr.mxu0 0.0
    %200 = vmatpush2.msra.mxu0 0.0
    %201 = vmatprep.subr.mxu0 0.0
    %202 = vmatpush2.msra.mxu0 0.0
    %203 = vmatprep.subr.mxu0 0.0
    %204 = vmatpush2.msra.mxu0 0.0
    %205 = vmatprep.subr.mxu0 0.0
    %206 = vmatpush2.msra.mxu0 0.0
    %207 = vmatprep.subr.mxu0 0.0
    %208 = vmatpush2.msra.mxu0 0.0
    %209 = vmatprep.subr.mxu0 0.0
    %210 = vmatpush2.msra.mxu0 0.0
    %211 = vmatprep.subr.mxu0 0.0
    %212 = vmatpush2.msra.mxu0 0.0
    %213 = vmatprep.subr.mxu0 0.0
    %214 = vmatpush2.msra.mxu0 0.0
    %215 = vmatprep.subr.mxu0 0.0
    %216 = vmatpush2.msra.mxu0 0.0
    %217 = vmatprep.subr.mxu0 0.0
    %218 = vmatpush2.msra.mxu0 0.0
    %219 = vmatprep.subr.mxu0 0.0
    %220 = vmatpush2.msra.mxu0 0.0
    %221 = vmatprep.subr.mxu0 0.0
    %222 = vmatpush2.msra.mxu0 0.0
    %223 = vmatprep.subr.mxu0 0.0
    %224 = vmatpush2.msra.mxu0 0.0
    %225 = vmatprep.subr.mxu0 0.0
    %226 = vmatpush2.msra.mxu0 0.0
    %227 = vmatprep.mubr.f32.mxu0 0.0
    %228 = vmatmul.mubr.f32.gmra.mxu0 %v161
    %v229 = vpop.f32.mrf.mxu0
    %v230 = vadd.f32 %v158, %v229
    %v231 = vpop.f32.mrf.mxu0
    %232 = vdwg.mxu0
    %v233 = vlaneseq
    %v234 = vand.u32 %v233, 127
    %vm235 = vcmp.ge.s32.totalorder %v234, 32
    %vm236 = vcmp.lt.s32.totalorder %v234, 64
    %vm237 = vmand %vm235, %vm236
    %v238 = vxor.u32 %v230, 2147483648
    %v239 = vmul.f32 %v238, 1.442695
    %v240 = vpow.pop %v239
    %v241 = vadd.f32 %v240, 1.0
    %v242 = vrcp.pop %v241
    %v243 = vmul.f32 1.0, %v242
    %v244 = vmul.f32 %v243, 9.9999
    %v245 = vadd.f32 %v244, 0.0001
    %v246 = vsel %vm237, %v245, %v230
    %247 = vst [vmem:[#allocation2] sm:$0xff] %v246
    // Predicated region
    $region30: #{tpu_custom_call.1} parent=1 // pred_check
      _
    $region31: #{tpu_custom_call.1} parent=1 // pred_check_branch
      %249 = sbr.rel (0) target = $region33
    $region32: #{tpu_custom_call.1} parent=1 // pred_region
      %s251 = ssub.s32 128, 128
      %252 = vsyncadd [#allocation3], %s251
      %s254 = sshll.u32 [#allocation2], 4
      %s255 = int_to_ptr.vmem [resolvable:$true] %s254
      %257 = dma.vmem_to_hbm [thread:$0]  %s255, 128, %s7, [#allocation3]
    $region33: #{tpu_custom_call.1} parent=1 // pred_fallthru
      _
    // Predicated region
    $region34: #{tpu_custom_call.1} parent=1 // pred_check
      _
    $region35: #{tpu_custom_call.1} parent=1 // pred_check_branch
      %259 = sbr.rel (0) target = $region37
    $region36: #{tpu_custom_call.1} parent=1 // pred_region
      %260 = dma.done [#allocation3], 128
    $region37: #{tpu_custom_call.1} parent=1 // pred_fallthru
      _
    %261 = vsyncpa [#allocation3], 1

</llo_original>
